<compile_context>
chip_gen: v6e
topology: v6e:2x2x1
jax: 0.10.0
libtpu: 0.0.40
codegen_flags: <defaults>
</compile_context>

<pallas_src>
import jax
import jax.numpy as jnp
from jax.experimental import pallas as pl
from jax.experimental.pallas import tpu as pltpu

LANE = 128
SUBLANE = 8


def _round_up(x, m):
    return ((x + m - 1) // m) * m


def cbow_kernel(ids_ref, emb_ref, w_ref, b_ref, out_ref, acc_ref):
    """Grid = (batch_tiles, vocab_tiles); vocab axis is the reduction axis."""
    k = pl.program_id(1)

    @pl.when(k == 0)
    def _():
        acc_ref[...] = jnp.zeros_like(acc_ref)

    ids = ids_ref[...]                         # [TB, S] int32
    tb, seq_len = ids.shape
    tv = emb_ref.shape[0]

    # Token-count matrix for this vocab tile:
    #   counts[b, v] = #{ s : ids[b, s] == k*TV + v }
    # Built with S VPU compare+adds over a 2-D [TB, TV] iota (no 3-D one-hot,
    # no cross-sublane reduction).  Global column offset handles V tiling.
    # S is tiny and static, so a static unroll is fine; the live counts tile
    # is bounded by the wrapper's tile defaults (TB*TV*4 <= ~512 KiB).
    col = jax.lax.broadcasted_iota(jnp.int32, (tb, tv), 1) + k * tv
    counts = jnp.zeros((tb, tv), jnp.float32)
    for s in range(seq_len):
        counts = counts + (ids[:, s:s + 1] == col).astype(jnp.float32)

    # Partial bag-of-words embedding sum for this vocab tile on the MXU:
    #   acc += counts[TB, TV] @ emb_tile[TV, D]      (f32 accumulation)
    # counts are small exact integers, so the cast to the (possibly bf16)
    # table dtype is exact.
    acc_ref[...] += jnp.dot(counts.astype(emb_ref.dtype), emb_ref[...],
                            preferred_element_type=jnp.float32)

    # Finalize on the last vocab tile: fc layer + lane-dense store.
    # (w_ref / b_ref are already f32; no per-finalize format convert.)
    @pl.when(k == pl.num_programs(1) - 1)
    def _():
        logits = jnp.dot(acc_ref[...], w_ref[...],
                         preferred_element_type=jnp.float32) + b_ref[...]
        out_ref[...] = logits.astype(out_ref.dtype)


def cbow_forward(ids, embed_table, fc_weight, fc_bias, *,
                 batch_tile=128, vocab_tile=1024, min_batch_tiles=1,
                 table_dtype=jnp.bfloat16, emb_buffers=2):
    """CBOW forward pass.

    ids:         [B, S] int   token ids (any int dtype; cast to int32)
    embed_table: [V, D] float embedding matrix
    fc_weight:   [C, D] float (PyTorch nn.Linear layout)
    fc_bias:     [C]    float
    batch_tile:      rows per batch tile (128 default; 256 good on v6e/v7x).
    vocab_tile:      table rows streamed per grid step.
    min_batch_tiles: set to 2 on v7x so both TensorCores get a batch tile.
    table_dtype:     dtype for the streamed table (bf16 default halves HBM
                     bytes; use jnp.float32 / None for exact numerics).
    emb_buffers:     pipeline depth for the streamed table tile (3 helps v5e).
    returns:     [B, C] float32 logits

    Note: out-of-range / negative token ids (e.g. a -1 pad id) silently
    contribute nothing, whereas torch.nn.Embedding would raise.
    """
    B, S = ids.shape
    V, D = embed_table.shape
    C = fc_weight.shape[0]

    if table_dtype is not None and embed_table.dtype != table_dtype:
        embed_table = embed_table.astype(table_dtype)

    # Tile sizes (respect the (8, 128) layout constraint; tiles divide padded dims).
    TB = _round_up(min(batch_tile, B), SUBLANE)
    if min_batch_tiles > 1:
        per_tile = -(-B // min_batch_tiles)                 # ceil(B / tiles)
        TB = max(SUBLANE, min(TB, _round_up(per_tile, SUBLANE)))
    TV = _round_up(min(vocab_tile, V), SUBLANE)
    B_pad = _round_up(B, TB)
    V_pad = _round_up(V, TV)
    C_pad = _round_up(C, LANE)                 # lane-dense output / fc-N dim

    ids_p = ids.astype(jnp.int32)
    if B_pad != B:
        ids_p = jnp.pad(ids_p, ((0, B_pad - B), (0, 0)))    # dummy rows -> discarded
    emb_p = embed_table
    if V_pad != V:
        emb_p = jnp.pad(emb_p, ((0, V_pad - V), (0, 0)))     # zero rows, never matched
    w_p = jnp.pad(fc_weight.T.astype(jnp.float32),
                  ((0, 0), (0, C_pad - C)))                   # [D, C_pad] f32
    b_p = jnp.pad(fc_bias.reshape(1, C).astype(jnp.float32),
                  ((0, 0), (0, C_pad - C)))                   # [1, C_pad] f32

    grid = (B_pad // TB, V_pad // TV)

    # Streamed embedding-tile spec; optional deeper pipelining (v5e).
    emb_spec_kwargs = {}
    if emb_buffers is not None and emb_buffers != 2:
        emb_spec_kwargs["pipeline_mode"] = pl.Buffered(emb_buffers)
    emb_spec = pl.BlockSpec((TV, D), lambda i, k: (k, 0), **emb_spec_kwargs)

    grid_spec = pltpu.PrefetchScalarGridSpec(
        num_scalar_prefetch=0,
        grid=grid,
        in_specs=[
            pl.BlockSpec((TB, S), lambda i, k: (i, 0)),      # ids block
            emb_spec,                                        # streamed table tile
            pl.BlockSpec((D, C_pad), lambda i, k: (0, 0)),   # fc weight (resident)
            pl.BlockSpec((1, C_pad), lambda i, k: (0, 0)),   # fc bias  (resident)
        ],
        out_specs=pl.BlockSpec((TB, C_pad), lambda i, k: (i, 0)),
        scratch_shapes=[pltpu.VMEM((TB, D), jnp.float32)],   # embeds_sum accumulator
    )

    out = pl.pallas_call(
        cbow_kernel,
        out_shape=jax.ShapeDtypeStruct((B_pad, C_pad), jnp.float32),
        grid_spec=grid_spec,
        compiler_params=pltpu.CompilerParams(
            dimension_semantics=("parallel", "arbitrary"),
            # Plenty for these tiles; safe on v5e/v6e (128 MiB) and v7x (64 MiB).
            vmem_limit_bytes=32 * 1024 * 1024,
        ),
    )(ids_p, emb_p, w_p, b_p)

    return out[:B, :C]


if __name__ == "__main__":
    # Small deterministic problem.
    VOCAB = 256     # vocab_size
    D = 128         # embedding_dim
    C = 8           # n_classes
    B = 16          # batch
    S = 8           # tokens per example

    key = jax.random.PRNGKey(0)
    k_ids, k_emb, k_w, k_b = jax.random.split(key, 4)

    ids = jax.random.randint(k_ids, (B, S), 0, VOCAB, dtype=jnp.int32)
    embed_table = jax.random.normal(k_emb, (VOCAB, D), dtype=jnp.float32) * 0.1
    fc_weight = jax.random.normal(k_w, (C, D), dtype=jnp.float32) * 0.1
    fc_bias = jax.random.normal(k_b, (C,), dtype=jnp.float32) * 0.1

    # Pure-JAX reference (gather + sum + linear).
    ref = jnp.take(embed_table, ids, axis=0).sum(axis=1) @ fc_weight.T + fc_bias

    # 1) Default fast path: bf16 streamed table, large tiles (single tile here
    #    since B=16, V=256 are small).  Loose tolerance for the bf16 rounding
    #    of the embedding values.
    logits = cbow_forward(ids, embed_table, fc_weight, fc_bias)
    logits = jax.block_until_ready(logits)
    assert logits.shape == (B, C)
    assert jnp.allclose(logits, ref, atol=3e-2, rtol=3e-2), "bf16 path mismatch"

    # 2) Multi-tile grid (2 batch tiles x 2 vocab tiles) with an f32 table:
    #    exercises init / accumulate / finalize across the V reduction and the
    #    exact-numerics path, checked at tight tolerance.
    logits_f32 = cbow_forward(ids, embed_table, fc_weight, fc_bias,
                              batch_tile=8, vocab_tile=128,
                              table_dtype=jnp.float32)
    logits_f32 = jax.block_until_ready(logits_f32)
    assert jnp.allclose(logits_f32, ref, atol=1e-4, rtol=1e-4), "f32 path mismatch"

    print("KERNEL_OK")
</pallas_src>

<mosaic_0001>
module attributes {stable_mosaic.version = 11 : i64} {
  func.func @cbow_kernel(%arg0: i32, %arg1: i32, %arg2: memref<16x8xi32, #tpu.memory_space<vmem>>, %arg3: memref<256x128xbf16, #tpu.memory_space<vmem>>, %arg4: memref<128x128xf32, #tpu.memory_space<vmem>>, %arg5: memref<1x128xf32, #tpu.memory_space<vmem>>, %arg6: memref<16x128xf32, #tpu.memory_space<vmem>>, %arg7: memref<16x128xf32, #tpu.memory_space<vmem>>) attributes {dimension_semantics = [#tpu.dimension_semantics<parallel>, #tpu.dimension_semantics<arbitrary>], iteration_bounds = array<i64: 1, 1>, scalar_prefetch = 0 : i64, scratch_operands = 1 : i64, tpu.core_type = #tpu.core_type<tc>, window_params = [{transform_indices = @transform_0, window_bounds = array<i64: 16, 8>}, {transform_indices = @transform_1, window_bounds = array<i64: 256, 128>}, {pipeline_mode = #tpu.pipeline_mode<synchronous>, transform_indices = @transform_2, window_bounds = array<i64: 128, 128>}, {pipeline_mode = #tpu.pipeline_mode<synchronous>, transform_indices = @transform_3, window_bounds = array<i64: 1, 128>}, {transform_indices = @transform_4, window_bounds = array<i64: 16, 128>}]} {
    %c0_i32 = arith.constant 0 : i32
    %0 = arith.cmpi eq, %arg1, %c0_i32 : i32
    %1 = arith.extui %0 : i1 to i32
    %c0_i32_0 = arith.constant 0 : i32
    %2 = arith.cmpi ne, %1, %c0_i32_0 : i32
    scf.if %2 {
      %cst_11 = arith.constant 0.000000e+00 : f32
      %66 = vector.broadcast %cst_11 : f32 to vector<16x128xf32>
      %c0_12 = arith.constant 0 : index
      %c0_13 = arith.constant 0 : index
      %67 = vector.load %arg7[%c0_12, %c0_13] : memref<16x128xf32, #tpu.memory_space<vmem>>, vector<16x128xf32>
      tpu.vector_store %arg7[%c0_12, %c0_13], %66 {strides = array<i32>} : memref<16x128xf32, #tpu.memory_space<vmem>>, vector<16x128xf32>,
    } else {
    }
    %c0 = arith.constant 0 : index
    %c0_1 = arith.constant 0 : index
    %3 = vector.load %arg2[%c0, %c0_1] : memref<16x8xi32, #tpu.memory_space<vmem>>, vector<16x8xi32>
    %4 = tpu.iota {dimensions = array<i32: 1>} : vector<16x256xi32>
    %c256_i32 = arith.constant 256 : i32
    %5 = arith.muli %arg1, %c256_i32 : i32
    %6 = vector.broadcast %5 : i32 to vector<16x256xi32>
    %7 = arith.addi %4, %6 : vector<16x256xi32>
    %cst = arith.constant 0.000000e+00 : f32
    %8 = vector.broadcast %cst : f32 to vector<16x256xf32>
    %9 = vector.extract_strided_slice %3 {offsets = [0, 0], sizes = [16, 1], strides = [1, 1]} : vector<16x8xi32> to vector<16x1xi32>
    %10 = vector.broadcast %9 : vector<16x1xi32> to vector<16x256xi32>
    %11 = arith.cmpi eq, %10, %7 : vector<16x256xi32>
    %12 = arith.extui %11 : vector<16x256xi1> to vector<16x256xi32>
    %13 = arith.sitofp %12 : vector<16x256xi32> to vector<16x256xf32>
    %14 = arith.addf %8, %13 : vector<16x256xf32>
    %15 = vector.extract_strided_slice %3 {offsets = [0, 1], sizes = [16, 1], strides = [1, 1]} : vector<16x8xi32> to vector<16x1xi32>
    %16 = vector.broadcast %15 : vector<16x1xi32> to vector<16x256xi32>
    %17 = arith.cmpi eq, %16, %7 : vector<16x256xi32>
    %18 = arith.extui %17 : vector<16x256xi1> to vector<16x256xi32>
    %19 = arith.sitofp %18 : vector<16x256xi32> to vector<16x256xf32>
    %20 = arith.addf %14, %19 : vector<16x256xf32>
    %21 = vector.extract_strided_slice %3 {offsets = [0, 2], sizes = [16, 1], strides = [1, 1]} : vector<16x8xi32> to vector<16x1xi32>
    %22 = vector.broadcast %21 : vector<16x1xi32> to vector<16x256xi32>
    %23 = arith.cmpi eq, %22, %7 : vector<16x256xi32>
    %24 = arith.extui %23 : vector<16x256xi1> to vector<16x256xi32>
    %25 = arith.sitofp %24 : vector<16x256xi32> to vector<16x256xf32>
    %26 = arith.addf %20, %25 : vector<16x256xf32>
    %27 = vector.extract_strided_slice %3 {offsets = [0, 3], sizes = [16, 1], strides = [1, 1]} : vector<16x8xi32> to vector<16x1xi32>
    %28 = vector.broadcast %27 : vector<16x1xi32> to vector<16x256xi32>
    %29 = arith.cmpi eq, %28, %7 : vector<16x256xi32>
    %30 = arith.extui %29 : vector<16x256xi1> to vector<16x256xi32>
    %31 = arith.sitofp %30 : vector<16x256xi32> to vector<16x256xf32>
    %32 = arith.addf %26, %31 : vector<16x256xf32>
    %33 = vector.extract_strided_slice %3 {offsets = [0, 4], sizes = [16, 1], strides = [1, 1]} : vector<16x8xi32> to vector<16x1xi32>
    %34 = vector.broadcast %33 : vector<16x1xi32> to vector<16x256xi32>
    %35 = arith.cmpi eq, %34, %7 : vector<16x256xi32>
    %36 = arith.extui %35 : vector<16x256xi1> to vector<16x256xi32>
    %37 = arith.sitofp %36 : vector<16x256xi32> to vector<16x256xf32>
    %38 = arith.addf %32, %37 : vector<16x256xf32>
    %39 = vector.extract_strided_slice %3 {offsets = [0, 5], sizes = [16, 1], strides = [1, 1]} : vector<16x8xi32> to vector<16x1xi32>
    %40 = vector.broadcast %39 : vector<16x1xi32> to vector<16x256xi32>
    %41 = arith.cmpi eq, %40, %7 : vector<16x256xi32>
    %42 = arith.extui %41 : vector<16x256xi1> to vector<16x256xi32>
    %43 = arith.sitofp %42 : vector<16x256xi32> to vector<16x256xf32>
    %44 = arith.addf %38, %43 : vector<16x256xf32>
    %45 = vector.extract_strided_slice %3 {offsets = [0, 6], sizes = [16, 1], strides = [1, 1]} : vector<16x8xi32> to vector<16x1xi32>
    %46 = vector.broadcast %45 : vector<16x1xi32> to vector<16x256xi32>
    %47 = arith.cmpi eq, %46, %7 : vector<16x256xi32>
    %48 = arith.extui %47 : vector<16x256xi1> to vector<16x256xi32>
    %49 = arith.sitofp %48 : vector<16x256xi32> to vector<16x256xf32>
    %50 = arith.addf %44, %49 : vector<16x256xf32>
    %51 = vector.extract_strided_slice %3 {offsets = [0, 7], sizes = [16, 1], strides = [1, 1]} : vector<16x8xi32> to vector<16x1xi32>
    %52 = vector.broadcast %51 : vector<16x1xi32> to vector<16x256xi32>
    %53 = arith.cmpi eq, %52, %7 : vector<16x256xi32>
    %54 = arith.extui %53 : vector<16x256xi1> to vector<16x256xi32>
    %55 = arith.sitofp %54 : vector<16x256xi32> to vector<16x256xf32>
    %56 = arith.addf %50, %55 : vector<16x256xf32>
    %c0_2 = arith.constant 0 : index
    %c0_3 = arith.constant 0 : index
    %57 = vector.load %arg7[%c0_2, %c0_3] : memref<16x128xf32, #tpu.memory_space<vmem>>, vector<16x128xf32>
    %58 = arith.truncf %56 : vector<16x256xf32> to vector<16x256xbf16>
    %c0_4 = arith.constant 0 : index
    %c0_5 = arith.constant 0 : index
    %59 = vector.load %arg3[%c0_4, %c0_5] : memref<256x128xbf16, #tpu.memory_space<vmem>>, vector<256x128xbf16>
    %cst_6 = arith.constant dense<0.000000e+00> : vector<16x128xf32>
    %60 = tpu.matmul %58, %59, %cst_6 {dimension_numbers = #tpu.dot_dimension_numbers<[1], [0], [0], [1], [0, 0, 1, 1], [], []>} : vector<16x256xbf16>, vector<256x128xbf16>, vector<16x128xf32> -> vector<16x128xf32>
    %61 = arith.addf %57, %60 : vector<16x128xf32>
    %c0_7 = arith.constant 0 : index
    %c0_8 = arith.constant 0 : index
    %62 = vector.load %arg7[%c0_7, %c0_8] : memref<16x128xf32, #tpu.memory_space<vmem>>, vector<16x128xf32>
    tpu.vector_store %arg7[%c0_7, %c0_8], %61 {strides = array<i32>} : memref<16x128xf32, #tpu.memory_space<vmem>>, vector<16x128xf32>,
    %c0_i32_9 = arith.constant 0 : i32
    %63 = arith.cmpi eq, %arg1, %c0_i32_9 : i32
    %64 = arith.extui %63 : i1 to i32
    %c0_i32_10 = arith.constant 0 : i32
    %65 = arith.cmpi ne, %64, %c0_i32_10 : i32
    scf.if %65 {
      %c0_11 = arith.constant 0 : index
      %c0_12 = arith.constant 0 : index
      %66 = vector.load %arg7[%c0_11, %c0_12] : memref<16x128xf32, #tpu.memory_space<vmem>>, vector<16x128xf32>
      %c0_13 = arith.constant 0 : index
      %c0_14 = arith.constant 0 : index
      %67 = vector.load %arg4[%c0_13, %c0_14] : memref<128x128xf32, #tpu.memory_space<vmem>>, vector<128x128xf32>
      %cst_15 = arith.constant dense<0.000000e+00> : vector<16x128xf32>
      %68 = tpu.matmul %66, %67, %cst_15 {dimension_numbers = #tpu.dot_dimension_numbers<[1], [0], [0], [1], [0, 0, 1, 1], [], []>} : vector<16x128xf32>, vector<128x128xf32>, vector<16x128xf32> -> vector<16x128xf32>
      %c0_16 = arith.constant 0 : index
      %c0_17 = arith.constant 0 : index
      %69 = vector.load %arg5[%c0_16, %c0_17] : memref<1x128xf32, #tpu.memory_space<vmem>>, vector<1x128xf32>
      %70 = vector.broadcast %69 : vector<1x128xf32> to vector<16x128xf32>
      %71 = arith.addf %68, %70 : vector<16x128xf32>
      %c0_18 = arith.constant 0 : index
      %c0_19 = arith.constant 0 : index
      %72 = vector.load %arg6[%c0_18, %c0_19] : memref<16x128xf32, #tpu.memory_space<vmem>>, vector<16x128xf32>
      tpu.vector_store %arg6[%c0_18, %c0_19], %71 {strides = array<i32>} : memref<16x128xf32, #tpu.memory_space<vmem>>, vector<16x128xf32>,
    } else {
    }
    return
  }
  func.func @transform_0(%arg0: i32, %arg1: i32) -> (i32, i32) {
    %c0_i32 = arith.constant 0 : i32
    %c0_i32_0 = arith.constant 0 : i32
    return %arg0, %c0_i32 : i32, i32
  }
  func.func @transform_1(%arg0: i32, %arg1: i32) -> (i32, i32) {
    %c0_i32 = arith.constant 0 : i32
    %c0_i32_0 = arith.constant 0 : i32
    return %arg1, %c0_i32 : i32, i32
  }
  func.func @transform_2(%arg0: i32, %arg1: i32) -> (i32, i32) {
    %c0_i32 = arith.constant 0 : i32
    %c0_i32_0 = arith.constant 0 : i32
    %c0_i32_1 = arith.constant 0 : i32
    return %c0_i32, %c0_i32_0 : i32, i32
  }
  func.func @transform_3(%arg0: i32, %arg1: i32) -> (i32, i32) {
    %c0_i32 = arith.constant 0 : i32
    %c0_i32_0 = arith.constant 0 : i32
    %c0_i32_1 = arith.constant 0 : i32
    return %c0_i32, %c0_i32_0 : i32, i32
  }
  func.func @transform_4(%arg0: i32, %arg1: i32) -> (i32, i32) {
    %c0_i32 = arith.constant 0 : i32
    %c0_i32_0 = arith.constant 0 : i32
    return %arg0, %c0_i32 : i32, i32
  }
}

</mosaic_0001>

<llo_original>
// kernel: tpu_custom_call.1
$region0: #{tpu_custom_call.1}
  #allocation0 [shape = 'u32[]', space=smem, size = 0x4, offset = 0x4, fixed_abs, tag = 'smem constant byte address 0x4 - core index']
  #allocation1 [shape = 'u32[144,128]{1,0:T(1,128)}', space=vmem, size = 0x12000, scoped, tag = 'internal scratch']
  #allocation2 [shape = 'f32[16,128]{1,0:T(8,128)}', space=vmem, size = 0x2000, scoped, tag = 'scratch operand']
  %s0 = inlined_call_operand.vmem [shape: s32[16,8], index: 0, kind: input, shape index: {}]
  %s1 = inlined_call_operand.hbm [shape: bf16[256,128], index: 1, kind: input, shape index: {}]
  %s2 = inlined_call_operand.hbm [shape: f32[128,128], index: 2, kind: input, shape index: {}]
  %s3 = inlined_call_operand.vmem [shape: f32[1,128], index: 3, kind: input, shape index: {}]
  %s4 = inlined_call_operand.hbm [shape: f32[16,128], index: 4, kind: output, shape index: {}]
  %s5 = sld [smem:[#allocation0]]
  $region42: #{tpu_custom_call.1} parent=0
    _
  %s7 = ssub.s32 1, %s5
  %s8 = scalar_select 0, %s7, %s5
  $region1: #{tpu_custom_call.1} parent=0
    #allocation3 [shape = 'u8[65536]{0}', space=vmem, size = 0x10000, scoped, tag = 'input window, operand 1, single buffered']
    #allocation4 [shape = 's32[1]{0}', space=sflag, size = 0x4, scoped, tag = 'scoped memory for tpu_custom_call.1']
    #allocation5 [shape = 's32[1]{0}', space=sflag, size = 0x4, scoped, tag = 'scoped memory for tpu_custom_call.1']
    #allocation6 [shape = 'u8[65536]{0}', space=vmem, size = 0x10000, scoped, tag = 'input window, operand 2, single buffered']
    #allocation7 [shape = 's32[1]{0}', space=sflag, size = 0x4, scoped, tag = 'scoped memory for tpu_custom_call.1']
    #allocation8 [shape = 'u8[8192]{0}', space=vmem, size = 0x2000, scoped, tag = 'output window, operand 0, single buffered']
    %9 = vsyncpa [#allocation4], 0
    %10 = vsyncpa [#allocation7], 0
    %11 = vsyncpa [#allocation5], 0
    // Predicated region
    $region2: #{tpu_custom_call.1} parent=1 // pred_check
      _
    $region3: #{tpu_custom_call.1} parent=1 // pred_check_branch
      %13 = sbr.rel (0) target = $region5
    $region4: #{tpu_custom_call.1} parent=1 // pred_region
      _
    $region5: #{tpu_custom_call.1} parent=1 // pred_fallthru
      _
    // Predicated region
    $region6: #{tpu_custom_call.1} parent=1 // pred_check
      _
    $region7: #{tpu_custom_call.1} parent=1 // pred_check_branch
      %15 = sbr.rel (0) target = $region9
    $region8: #{tpu_custom_call.1} parent=1 // pred_region
      %s17 = ssub.s32 2048, 2048
      %18 = vsyncadd [#allocation4], %s17
      %s19 = sshll.u32 [#allocation3], 4
      %s20 = int_to_ptr.vmem [resolvable:$true] %s19
      %25 = dma.hbm_to_vmem [thread:$0]  %s1, 2048, %s20, [#allocation4], 64, 64, 4
    $region9: #{tpu_custom_call.1} parent=1 // pred_fallthru
      _
    // Predicated region
    $region10: #{tpu_custom_call.1} parent=1 // pred_check
      _
    $region11: #{tpu_custom_call.1} parent=1 // pred_check_branch
      %27 = sbr.rel (0) target = $region13
    $region12: #{tpu_custom_call.1} parent=1 // pred_region
      %s29 = ssub.s32 2048, 2048
      %30 = vsyncadd [#allocation7], %s29
      %s31 = sshll.u32 [#allocation6], 4
      %s32 = int_to_ptr.vmem [resolvable:$true] %s31
      %37 = dma.hbm_to_vmem [thread:$0]  %s2, 2048, %s32, [#allocation7], 128, 128, 8
    $region13: #{tpu_custom_call.1} parent=1 // pred_fallthru
      _
    // Predicated region
    $region14: #{tpu_custom_call.1} parent=1 // pred_check
      _
    $region15: #{tpu_custom_call.1} parent=1 // pred_check_branch
      %39 = sbr.rel (0) target = $region17
    $region16: #{tpu_custom_call.1} parent=1 // pred_region
      _
    $region17: #{tpu_custom_call.1} parent=1 // pred_fallthru
      _
    // Predicated region
    $region18: #{tpu_custom_call.1} parent=1 // pred_check
      _
    $region19: #{tpu_custom_call.1} parent=1 // pred_check_branch
      %41 = sbr.rel (0) target = $region21
    $region20: #{tpu_custom_call.1} parent=1 // pred_region
      %42 = dma.done [#allocation4], 2048
    $region21: #{tpu_custom_call.1} parent=1 // pred_fallthru
      _
    // Predicated region
    $region22: #{tpu_custom_call.1} parent=1 // pred_check
      _
    $region23: #{tpu_custom_call.1} parent=1 // pred_check_branch
      %44 = sbr.rel (0) target = $region25
    $region24: #{tpu_custom_call.1} parent=1 // pred_region
      %45 = dma.done [#allocation7], 2048
    $region25: #{tpu_custom_call.1} parent=1 // pred_fallthru
      _
    %p47 = scmp.eq.s32.totalorder 0, 0
    // Predicated region
    $region26: #{tpu_custom_call.1} parent=1 // pred_check
      %p48 = pneg %p47
    $region27: #{tpu_custom_call.1} parent=1 // pred_check_branch
      %50 = sbr.rel (%p48) target = $region29
    $region28: #{tpu_custom_call.1} parent=1 // pred_region
      %51 = vst [vmem:[#allocation2] sm:$0xff] 0.0
      %52 = vst [vmem:[#allocation2 + $0x8] sm:$0xff] 0.0
    $region29: #{tpu_custom_call.1} parent=1 // pred_fallthru
      _
    %v53 = vld [vmem:[%s0] sm:$0xff]
    %v54 = vld [vmem:[%s0 + $0x8] sm:$0xff]
    %v55 = vlaneseq
    %v56 = vand.u32 %v55, 127
    %v57 = vadd.s32 %v56, 128
    %s58 = smul.u32 0, 256
    %v59 = vstv %s58
    %v60 = vadd.s32 %v56, %v59
    %v61 = vadd.s32 %v57, %v59
    %62 = vset.pattern.permute.xlu0 0
    %63 = vperm.xlu0 %62, %v53
    %v64 = vpop.permute.xlu0 %63
    %65 = vset.pattern.permute.xlu0 0
    %66 = vperm.xlu0 %65, %v54
    %v67 = vpop.permute.xlu0 %66
    %vm68 = vcmp.eq.s32.totalorder %v64, %v60
    %vm69 = vcmp.eq.s32.totalorder %v64, %v61
    %vm70 = vcmp.eq.s32.totalorder %v67, %v60
    %vm71 = vcmp.eq.s32.totalorder %v67, %v61
    %v72 = vsel %vm68, 1, 0
    %v73 = vsel %vm69, 1, 0
    %v74 = vsel %vm70, 1, 0
    %v75 = vsel %vm71, 1, 0
    %v76 = vcvt.s32.f32 %v72
    %v77 = vcvt.s32.f32 %v73
    %v78 = vcvt.s32.f32 %v74
    %v79 = vcvt.s32.f32 %v75
    %v80 = vadd.f32 %v76, 0.0
    %v81 = vadd.f32 %v77, 0.0
    %v82 = vadd.f32 %v78, 0.0
    %v83 = vadd.f32 %v79, 0.0
    %84 = vset.pattern.permute.xlu0 1
    %85 = vperm.xlu0 %84, %v53
    %v86 = vpop.permute.xlu0 %85
    %87 = vset.pattern.permute.xlu0 1
    %88 = vperm.xlu0 %87, %v54
    %v89 = vpop.permute.xlu0 %88
    %vm90 = vcmp.eq.s32.totalorder %v86, %v60
    %vm91 = vcmp.eq.s32.totalorder %v86, %v61
    %vm92 = vcmp.eq.s32.totalorder %v89, %v60
    %vm93 = vcmp.eq.s32.totalorder %v89, %v61
    %v94 = vsel %vm90, 1, 0
    %v95 = vsel %vm91, 1, 0
    %v96 = vsel %vm92, 1, 0
    %v97 = vsel %vm93, 1, 0
    %v98 = vcvt.s32.f32 %v94
    %v99 = vcvt.s32.f32 %v95
    %v100 = vcvt.s32.f32 %v96
    %v101 = vcvt.s32.f32 %v97
    %v102 = vadd.f32 %v80, %v98
    %v103 = vadd.f32 %v81, %v99
    %v104 = vadd.f32 %v82, %v100
    %v105 = vadd.f32 %v83, %v101
    %106 = vset.pattern.permute.xlu0 2
    %107 = vperm.xlu0 %106, %v53
    %v108 = vpop.permute.xlu0 %107
    %109 = vset.pattern.permute.xlu0 2
    %110 = vperm.xlu0 %109, %v54
    %v111 = vpop.permute.xlu0 %110
    %vm112 = vcmp.eq.s32.totalorder %v108, %v60
    %vm113 = vcmp.eq.s32.totalorder %v108, %v61
    %vm114 = vcmp.eq.s32.totalorder %v111, %v60
    %vm115 = vcmp.eq.s32.totalorder %v111, %v61
    %v116 = vsel %vm112, 1, 0
    %v117 = vsel %vm113, 1, 0
    %v118 = vsel %vm114, 1, 0
    %v119 = vsel %vm115, 1, 0
    %v120 = vcvt.s32.f32 %v116
    %v121 = vcvt.s32.f32 %v117
    %v122 = vcvt.s32.f32 %v118
    %v123 = vcvt.s32.f32 %v119
    %v124 = vadd.f32 %v102, %v120
    %v125 = vadd.f32 %v103, %v121
    %v126 = vadd.f32 %v104, %v122
    %v127 = vadd.f32 %v105, %v123
    %128 = vset.pattern.permute.xlu0 3
    %129 = vperm.xlu0 %128, %v53
    %v130 = vpop.permute.xlu0 %129
    %131 = vset.pattern.permute.xlu0 3
    %132 = vperm.xlu0 %131, %v54
    %v133 = vpop.permute.xlu0 %132
    %vm134 = vcmp.eq.s32.totalorder %v130, %v60
    %vm135 = vcmp.eq.s32.totalorder %v130, %v61
    %vm136 = vcmp.eq.s32.totalorder %v133, %v60
    %vm137 = vcmp.eq.s32.totalorder %v133, %v61
    %v138 = vsel %vm134, 1, 0
    %v139 = vsel %vm135, 1, 0
    %v140 = vsel %vm136, 1, 0
    %v141 = vsel %vm137, 1, 0
    %v142 = vcvt.s32.f32 %v138
    %v143 = vcvt.s32.f32 %v139
    %v144 = vcvt.s32.f32 %v140
    %v145 = vcvt.s32.f32 %v141
    %v146 = vadd.f32 %v124, %v142
    %v147 = vadd.f32 %v125, %v143
    %v148 = vadd.f32 %v126, %v144
    %v149 = vadd.f32 %v127, %v145
    %150 = vset.pattern.permute.xlu0 4
    %151 = vperm.xlu0 %150, %v53
    %v152 = vpop.permute.xlu0 %151
    %153 = vset.pattern.permute.xlu0 4
    %154 = vperm.xlu0 %153, %v54
    %v155 = vpop.permute.xlu0 %154
    %vm156 = vcmp.eq.s32.totalorder %v152, %v60
    %vm157 = vcmp.eq.s32.totalorder %v152, %v61
    %vm158 = vcmp.eq.s32.totalorder %v155, %v60
    %vm159 = vcmp.eq.s32.totalorder %v155, %v61
    %v160 = vsel %vm156, 1, 0
    %v161 = vsel %vm157, 1, 0
    %v162 = vsel %vm158, 1, 0
    %v163 = vsel %vm159, 1, 0
    %v164 = vcvt.s32.f32 %v160
    %v165 = vcvt.s32.f32 %v161
    %v166 = vcvt.s32.f32 %v162
    %v167 = vcvt.s32.f32 %v163
    %v168 = vadd.f32 %v146, %v164
    %v169 = vadd.f32 %v147, %v165
    %v170 = vadd.f32 %v148, %v166
    %v171 = vadd.f32 %v149, %v167
    %172 = vset.pattern.permute.xlu0 5
    %173 = vperm.xlu0 %172, %v53
    %v174 = vpop.permute.xlu0 %173
    %175 = vset.pattern.permute.xlu0 5
    %176 = vperm.xlu0 %175, %v54
    %v177 = vpop.permute.xlu0 %176
    %vm178 = vcmp.eq.s32.totalorder %v174, %v60
    %vm179 = vcmp.eq.s32.totalorder %v174, %v61
    %vm180 = vcmp.eq.s32.totalorder %v177, %v60
    %vm181 = vcmp.eq.s32.totalorder %v177, %v61
    %v182 = vsel %vm178, 1, 0
    %v183 = vsel %vm179, 1, 0
    %v184 = vsel %vm180, 1, 0
    %v185 = vsel %vm181, 1, 0
    %v186 = vcvt.s32.f32 %v182
    %v187 = vcvt.s32.f32 %v183
    %v188 = vcvt.s32.f32 %v184
    %v189 = vcvt.s32.f32 %v185
    %v190 = vadd.f32 %v168, %v186
    %v191 = vadd.f32 %v169, %v187
    %v192 = vadd.f32 %v170, %v188
    %v193 = vadd.f32 %v171, %v189
    %194 = vset.pattern.permute.xlu0 6
    %195 = vperm.xlu0 %194, %v53
    %v196 = vpop.permute.xlu0 %195
    %197 = vset.pattern.permute.xlu0 6
    %198 = vperm.xlu0 %197, %v54
    %v199 = vpop.permute.xlu0 %198
    %vm200 = vcmp.eq.s32.totalorder %v196, %v60
    %vm201 = vcmp.eq.s32.totalorder %v196, %v61
    %vm202 = vcmp.eq.s32.totalorder %v199, %v60
    %vm203 = vcmp.eq.s32.totalorder %v199, %v61
    %v204 = vsel %vm200, 1, 0
    %v205 = vsel %vm201, 1, 0
    %v206 = vsel %vm202, 1, 0
    %v207 = vsel %vm203, 1, 0
    %v208 = vcvt.s32.f32 %v204
    %v209 = vcvt.s32.f32 %v205
    %v210 = vcvt.s32.f32 %v206
    %v211 = vcvt.s32.f32 %v207
    %v212 = vadd.f32 %v190, %v208
    %v213 = vadd.f32 %v191, %v209
    %v214 = vadd.f32 %v192, %v210
    %v215 = vadd.f32 %v193, %v211
    %216 = vset.pattern.permute.xlu0 7
    %217 = vperm.xlu0 %216, %v53
    %v218 = vpop.permute.xlu0 %217
    %219 = vset.pattern.permute.xlu0 7
    %220 = vperm.xlu0 %219, %v54
    %v221 = vpop.permute.xlu0 %220
    %vm222 = vcmp.eq.s32.totalorder %v218, %v60
    %vm223 = vcmp.eq.s32.totalorder %v218, %v61
    %vm224 = vcmp.eq.s32.totalorder %v221, %v60
    %vm225 = vcmp.eq.s32.totalorder %v221, %v61
    %v226 = vsel %vm222, 1, 0
    %v227 = vsel %vm223, 1, 0
    %v228 = vsel %vm224, 1, 0
    %v229 = vsel %vm225, 1, 0
    %v230 = vcvt.s32.f32 %v226
    %v231 = vcvt.s32.f32 %v227
    %v232 = vcvt.s32.f32 %v228
    %v233 = vcvt.s32.f32 %v229
    %v234 = vadd.f32 %v212, %v230
    %v235 = vadd.f32 %v213, %v231
    %v236 = vadd.f32 %v214, %v232
    %v237 = vadd.f32 %v215, %v233
    %v238 = vld [vmem:[#allocation2] sm:$0xff]
    %v239 = vld [vmem:[#allocation2 + $0x8] sm:$0xff]
    %v240 = vpack.c.bf16 %v236, %v234
    %v241 = vpack.c.bf16 %v237, %v235
    %v242 = vld [vmem:[#allocation3] sm:$0xf]
    %v243 = vld [vmem:[#allocation3 + $0x4] sm:$0xf]
    %v244 = vld [vmem:[#allocation3 + $0x8] sm:$0xf]
    %v245 = vld [vmem:[#allocation3 + $0xc] sm:$0xf]
    %v246 = vld [vmem:[#allocation3 + $0x10] sm:$0xf]
    %v247 = vld [vmem:[#allocation3 + $0x14] sm:$0xf]
    %v248 = vld [vmem:[#allocation3 + $0x18] sm:$0xf]
    %v249 = vld [vmem:[#allocation3 + $0x1c] sm:$0xf]
    %v250 = vld [vmem:[#allocation3 + $0x20] sm:$0xf]
    %v251 = vld [vmem:[#allocation3 + $0x24] sm:$0xf]
    %v252 = vld [vmem:[#allocation3 + $0x28] sm:$0xf]
    %v253 = vld [vmem:[#allocation3 + $0x2c] sm:$0xf]
    %v254 = vld [vmem:[#allocation3 + $0x30] sm:$0xf]
    %v255 = vld [vmem:[#allocation3 + $0x34] sm:$0xf]
    %v256 = vld [vmem:[#allocation3 + $0x38] sm:$0xf]
    %v257 = vld [vmem:[#allocation3 + $0x3c] sm:$0xf]
    %v258 = vld [vmem:[#allocation3 + $0x40] sm:$0xf]
    %v259 = vld [vmem:[#allocation3 + $0x44] sm:$0xf]
    %v260 = vld [vmem:[#allocation3 + $0x48] sm:$0xf]
    %v261 = vld [vmem:[#allocation3 + $0x4c] sm:$0xf]
    %v262 = vld [vmem:[#allocation3 + $0x50] sm:$0xf]
    %v263 = vld [vmem:[#allocation3 + $0x54] sm:$0xf]
    %v264 = vld [vmem:[#allocation3 + $0x58] sm:$0xf]
    %v265 = vld [vmem:[#allocation3 + $0x5c] sm:$0xf]
    %v266 = vld [vmem:[#allocation3 + $0x60] sm:$0xf]
    %v267 = vld [vmem:[#allocation3 + $0x64] sm:$0xf]
    %v268 = vld [vmem:[#allocation3 + $0x68] sm:$0xf]
    %v269 = vld [vmem:[#allocation3 + $0x6c] sm:$0xf]
    %v270 = vld [vmem:[#allocation3 + $0x70] sm:$0xf]
    %v271 = vld [vmem:[#allocation3 + $0x74] sm:$0xf]
    %v272 = vld [vmem:[#allocation3 + $0x78] sm:$0xf]
    %v273 = vld [vmem:[#allocation3 + $0x7c] sm:$0xf]
    %v306 = vunpack.c.l.b16 %v242
    %v307 = vunpack.c.l.b16 %v243
    %v308 = vunpack.c.l.b16 %v244
    %v309 = vunpack.c.l.b16 %v245
    %v310 = vunpack.c.l.b16 %v246
    %v311 = vunpack.c.l.b16 %v247
    %v312 = vunpack.c.l.b16 %v248
    %v313 = vunpack.c.l.b16 %v249
    %v314 = vunpack.c.l.b16 %v250
    %v315 = vunpack.c.l.b16 %v251
    %v316 = vunpack.c.l.b16 %v252
    %v317 = vunpack.c.l.b16 %v253
    %v318 = vunpack.c.l.b16 %v254
    %v319 = vunpack.c.l.b16 %v255
    %v320 = vunpack.c.l.b16 %v256
    %v321 = vunpack.c.l.b16 %v257
    %v322 = vunpack.c.l.b16 %v258
    %v323 = vunpack.c.l.b16 %v259
    %v324 = vunpack.c.l.b16 %v260
    %v325 = vunpack.c.l.b16 %v261
    %v326 = vunpack.c.l.b16 %v262
    %v327 = vunpack.c.l.b16 %v263
    %v328 = vunpack.c.l.b16 %v264
    %v329 = vunpack.c.l.b16 %v265
    %v330 = vunpack.c.l.b16 %v266
    %v331 = vunpack.c.l.b16 %v267
    %v332 = vunpack.c.l.b16 %v268
    %v333 = vunpack.c.l.b16 %v269
    %v334 = vunpack.c.l.b16 %v270
    %v335 = vunpack.c.l.b16 %v271
    %v336 = vunpack.c.l.b16 %v272
    %v337 = vunpack.c.l.b16 %v273
    %v338 = vpack.c.b16 %v307, %v306
    %v339 = vpack.c.b16 %v309, %v308
    %v340 = vpack.c.b16 %v311, %v310
    %v341 = vpack.c.b16 %v313, %v312
    %v342 = vpack.c.b16 %v315, %v314
    %v343 = vpack.c.b16 %v317, %v316
    %v344 = vpack.c.b16 %v319, %v318
    %v345 = vpack.c.b16 %v321, %v320
    %v346 = vpack.c.b16 %v323, %v322
    %v347 = vpack.c.b16 %v325, %v324
    %v348 = vpack.c.b16 %v327, %v326
    %v349 = vpack.c.b16 %v329, %v328
    %v350 = vpack.c.b16 %v331, %v330
    %v351 = vpack.c.b16 %v333, %v332
    %v352 = vpack.c.b16 %v335, %v334
    %v353 = vpack.c.b16 %v337, %v336
    %370 = vmatprep.subr.bf16.mxu0 0
    %371 = vmatpush1.bf16.msra.mxu0 %v345
    %372 = vmatprep.subr.bf16.mxu0 0
    %373 = vmatpush1.bf16.msra.mxu0 %v344
    %374 = vmatprep.subr.bf16.mxu0 0
    %375 = vmatpush1.bf16.msra.mxu0 %v343
    %376 = vmatprep.subr.bf16.mxu0 0
    %377 = vmatpush1.bf16.msra.mxu0 %v342
    %378 = vmatprep.subr.bf16.mxu0 0
    %379 = vmatpush1.bf16.msra.mxu0 %v341
    %380 = vmatprep.subr.bf16.mxu0 0
    %381 = vmatpush1.bf16.msra.mxu0 %v340
    %382 = vmatprep.subr.bf16.mxu0 0
    %383 = vmatpush1.bf16.msra.mxu0 %v339
    %384 = vmatprep.subr.bf16.mxu0 0
    %385 = vmatpush1.bf16.msra.mxu0 %v338
    %386 = vmatprep.subr.bf16.mxu0 0
    %387 = vmatpush2.bf16.msra.mxu0 %v353
    %388 = vmatprep.subr.bf16.mxu0 0
    %389 = vmatpush2.bf16.msra.mxu0 %v352
    %390 = vmatprep.subr.bf16.mxu0 0
    %391 = vmatpush2.bf16.msra.mxu0 %v351
    %392 = vmatprep.subr.bf16.mxu0 0
    %393 = vmatpush2.bf16.msra.mxu0 %v350
    %394 = vmatprep.subr.bf16.mxu0 0
    %395 = vmatpush2.bf16.msra.mxu0 %v349
    %396 = vmatprep.subr.bf16.mxu0 0
    %397 = vmatpush2.bf16.msra.mxu0 %v348
    %398 = vmatprep.subr.bf16.mxu0 0
    %399 = vmatpush2.bf16.msra.mxu0 %v347
    %400 = vmatprep.subr.bf16.mxu0 0
    %401 = vmatpush2.bf16.msra.mxu0 %v346
    %402 = vmatprep.mubr.bf16.mxu0 %v241
    %403 = vmatmul.mubr.bf16.gmra.mxu0 %v240
    %v404 = vpop.f32.mrf.mxu0
    %v405 = vadd.f32 0.0, %v404
    %v406 = vpop.f32.mrf.mxu0
    %v407 = vpop.f32.mrf.mxu0
    %v408 = vadd.f32 0.0, %v407
    %v409 = vpop.f32.mrf.mxu0
    %410 = vdwg.mxu0
    %v411 = vadd.f32 %v238, %v405
    %v412 = vadd.f32 %v239, %v408
    %413 = vst [vmem:[#allocation2] sm:$0xff] %v411
    %414 = vst [vmem:[#allocation2 + $0x8] sm:$0xff] %v412
    // Predicated region
    $region30: #{tpu_custom_call.1} parent=1 // pred_check
      %p415 = pneg %p47
    $region31: #{tpu_custom_call.1} parent=1 // pred_check_branch
      %417 = sbr.rel (%p415) target = $region33
    $region32: #{tpu_custom_call.1} parent=1 // pred_region
      %v418 = vld [vmem:[#allocation2] sm:$0xff]
      %v419 = vld [vmem:[#allocation2 + $0x8] sm:$0xff]
      %v420 = vld [vmem:[#allocation6] sm:$0xff]
      %v421 = vld [vmem:[#allocation6 + $0x8] sm:$0xff]
      %v422 = vld [vmem:[#allocation6 + $0x10] sm:$0xff]
      %v423 = vld [vmem:[#allocation6 + $0x18] sm:$0xff]
      %v424 = vld [vmem:[#allocation6 + $0x20] sm:$0xff]
      %v425 = vld [vmem:[#allocation6 + $0x28] sm:$0xff]
      %v426 = vld [vmem:[#allocation6 + $0x30] sm:$0xff]
      %v427 = vld [vmem:[#allocation6 + $0x38] sm:$0xff]
      %v428 = vld [vmem:[#allocation6 + $0x40] sm:$0xff]
      %v429 = vld [vmem:[#allocation6 + $0x48] sm:$0xff]
      %v430 = vld [vmem:[#allocation6 + $0x50] sm:$0xff]
      %v431 = vld [vmem:[#allocation6 + $0x58] sm:$0xff]
      %v432 = vld [vmem:[#allocation6 + $0x60] sm:$0xff]
      %v433 = vld [vmem:[#allocation6 + $0x68] sm:$0xff]
      %v434 = vld [vmem:[#allocation6 + $0x70] sm:$0xff]
      %v435 = vld [vmem:[#allocation6 + $0x78] sm:$0xff]
      %v436 = vld [vmem:[%s3] sm:$0x1]
      %v438 = vlaneseq
      %v439 = vshrl.u32 %v438, 7
      %v440 = vsub.s32 0, %v439
      %v441 = vrot.slane %v436, %v440
      %443 = vmatprep.subr.mxu0 0.0
      %444 = vmatpush1.msra.mxu0 %v435
      %445 = vmatprep.subr.mxu0 0.0
      %446 = vmatpush1.msra.mxu0 %v434
      %447 = vmatprep.subr.mxu0 0.0
      %448 = vmatpush1.msra.mxu0 %v433
      %449 = vmatprep.subr.mxu0 0.0
      %450 = vmatpush1.msra.mxu0 %v432
      %451 = vmatprep.subr.mxu0 0.0
      %452 = vmatpush1.msra.mxu0 %v431
      %453 = vmatprep.subr.mxu0 0.0
      %454 = vmatpush1.msra.mxu0 %v430
      %455 = vmatprep.subr.mxu0 0.0
      %456 = vmatpush1.msra.mxu0 %v429
      %457 = vmatprep.subr.mxu0 0.0
      %458 = vmatpush1.msra.mxu0 %v428
      %459 = vmatprep.subr.mxu0 0.0
      %460 = vmatpush1.msra.mxu0 %v427
      %461 = vmatprep.subr.mxu0 0.0
      %462 = vmatpush1.msra.mxu0 %v426
      %463 = vmatprep.subr.mxu0 0.0
      %464 = vmatpush1.msra.mxu0 %v425
      %465 = vmatprep.subr.mxu0 0.0
      %466 = vmatpush1.msra.mxu0 %v424
      %467 = vmatprep.subr.mxu0 0.0
      %468 = vmatpush1.msra.mxu0 %v423
      %469 = vmatprep.subr.mxu0 0.0
      %470 = vmatpush1.msra.mxu0 %v422
      %471 = vmatprep.subr.mxu0 0.0
      %472 = vmatpush1.msra.mxu0 %v421
      %473 = vmatprep.subr.mxu0 0.0
      %474 = vmatpush1.msra.mxu0 %v420
      %475 = vmatprep.subr.mxu0 0.0
      %476 = vmatpush2.msra.mxu0 0.0
      %477 = vmatprep.subr.mxu0 0.0
      %478 = vmatpush2.msra.mxu0 0.0
      %479 = vmatprep.subr.mxu0 0.0
      %480 = vmatpush2.msra.mxu0 0.0
      %481 = vmatprep.subr.mxu0 0.0
      %482 = vmatpush2.msra.mxu0 0.0
      %483 = vmatprep.subr.mxu0 0.0
      %484 = vmatpush2.msra.mxu0 0.0
      %485 = vmatprep.subr.mxu0 0.0
      %486 = vmatpush2.msra.mxu0 0.0
      %487 = vmatprep.subr.mxu0 0.0
      %488 = vmatpush2.msra.mxu0 0.0
      %489 = vmatprep.subr.mxu0 0.0
      %490 = vmatpush2.msra.mxu0 0.0
      %491 = vmatprep.subr.mxu0 0.0
      %492 = vmatpush2.msra.mxu0 0.0
      %493 = vmatprep.subr.mxu0 0.0
      %494 = vmatpush2.msra.mxu0 0.0
      %495 = vmatprep.subr.mxu0 0.0
      %496 = vmatpush2.msra.mxu0 0.0
      %497 = vmatprep.subr.mxu0 0.0
      %498 = vmatpush2.msra.mxu0 0.0
      %499 = vmatprep.subr.mxu0 0.0
      %500 = vmatpush2.msra.mxu0 0.0
      %501 = vmatprep.subr.mxu0 0.0
      %502 = vmatpush2.msra.mxu0 0.0
      %503 = vmatprep.subr.mxu0 0.0
      %504 = vmatpush2.msra.mxu0 0.0
      %505 = vmatprep.subr.mxu0 0.0
      %506 = vmatpush2.msra.mxu0 0.0
      %507 = vmatprep.mubr.f32.mxu0 0.0
      %508 = vmatmul.mubr.f32.gmra.mxu0 %v418
      %v509 = vpop.f32.mrf.mxu0
      %v510 = vadd.f32 %v441, %v509
      %v511 = vpop.f32.mrf.mxu0
      %512 = vmatprep.mubr.f32.mxu0 0.0
      %513 = vmatmul.mubr.f32.gmra.mxu0 %v419
      %v514 = vpop.f32.mrf.mxu0
      %v515 = vadd.f32 %v441, %v514
      %v516 = vpop.f32.mrf.mxu0
      %517 = vdwg.mxu0
      %518 = vst [vmem:[#allocation8] sm:$0xff] %v510
      %519 = vst [vmem:[#allocation8 + $0x8] sm:$0xff] %v515
    $region33: #{tpu_custom_call.1} parent=1 // pred_fallthru
      _
    // Predicated region
    $region34: #{tpu_custom_call.1} parent=1 // pred_check
      _
    $region35: #{tpu_custom_call.1} parent=1 // pred_check_branch
      %521 = sbr.rel (0) target = $region37
    $region36: #{tpu_custom_call.1} parent=1 // pred_region
      %s523 = ssub.s32 256, 256
      %524 = vsyncadd [#allocation5], %s523
      %s525 = sshll.u32 [#allocation8], 4
      %s526 = int_to_ptr.vmem [resolvable:$true] %s525
      %531 = dma.vmem_to_hbm [thread:$0]  %s526, 256, %s4, [#allocation5], 128, 128, 8
    $region37: #{tpu_custom_call.1} parent=1 // pred_fallthru
      _
    // Predicated region
    $region38: #{tpu_custom_call.1} parent=1 // pred_check
      _
    $region39: #{tpu_custom_call.1} parent=1 // pred_check_branch
      %533 = sbr.rel (0) target = $region41
    $region40: #{tpu_custom_call.1} parent=1 // pred_region
      %534 = dma.done [#allocation5], 256
    $region41: #{tpu_custom_call.1} parent=1 // pred_fallthru
      _
    %535 = vsyncpa [#allocation4], 1
    %536 = vsyncpa [#allocation7], 1
    %537 = vsyncpa [#allocation5], 1

</llo_original>
